<compile_context>
chip_gen: v7x
topology: tpu7x:2x2x1
jax: 0.10.0
libtpu: 0.0.40
codegen_flags: <defaults>
</compile_context>

<pallas_src>
import functools

import jax
import jax.numpy as jnp
from jax.experimental import pallas as pl
from jax.experimental.pallas import tpu as pltpu


_LANE = 128      # lane width (last dim)
_SUBLANE = 8     # sublane width (second-to-last dim)


def _round_up(x, m):
    return (x + m - 1) // m * m


# ----------------------------- Pallas kernel -----------------------------

def _mlp_fused_kernel(*refs, n_layers, class_size, apply_softmax):
    """refs = (x, w0, b0, ..., w_{L-1}, b_{L-1}, out); all padded, VMEM tiles."""
    x_ref = refs[0]
    o_ref = refs[-1]
    p_refs = refs[1:-1]

    h = x_ref[...]                                           # f32 (tile_b, din0_p)
    for i in range(n_layers):
        w = p_refs[2 * i][...]                               # bf16 (din_p, dout_p)
        b = p_refs[2 * i + 1][...]                           # f32  (8, dout_p), full vreg
        # dropout (eval mode) == identity; Linear on the MXU (bf16 in, f32 acc).
        h = jnp.dot(h.astype(jnp.bfloat16), w,
                    preferred_element_type=jnp.float32)
        h = h + b[0:1, :]                                    # f32 bias add
        if i < n_layers - 1:
            h = jnp.maximum(h, 0.0)                          # ReLU (f32 VPU)

    if apply_softmax:
        # Mask zero-padded class lanes so they don't pollute the reduction.
        lane = jax.lax.broadcasted_iota(jnp.int32, h.shape, dimension=1)
        h = jnp.where(lane < class_size, h, -1e30)
        m = jnp.max(h, axis=-1, keepdims=True)
        e = jnp.exp(h - m)
        s = jnp.sum(e, axis=-1, keepdims=True)
        h = e / s                                            # exact: rows sum to 1

    o_ref[...] = h.astype(o_ref.dtype)


# ----------------------------- Parameter prep ------------------------------

def init_mlp_params(key, input_shape, class_size, fc_sizes):
    """PyTorch-style Linear init (U(+-1/sqrt(fan_in))); weights stored (in, out)."""
    _, seq_len, feat_dim = input_shape
    insize = feat_dim * seq_len
    sizes = [insize] + list(fc_sizes) + [class_size]
    params = []
    for i in range(len(sizes) - 1):
        key, kw, kb = jax.random.split(key, 3)
        fan_in, fan_out = sizes[i], sizes[i + 1]
        bound = 1.0 / jnp.sqrt(fan_in)
        w = jax.random.uniform(kw, (fan_in, fan_out), jnp.float32, -bound, bound)
        b = jax.random.uniform(kb, (fan_out,), jnp.float32, -bound, bound)
        params.append((w, b))
    return params


def prepare_mlp_params(params, input_shape, class_size):
    """One-time prep (run ONCE, keep outputs as persistent device arrays):
      * fold the PyTorch `input.transpose(1, 2)` + Flatten into the first weight
        (row permutation f*S+s -> s*F+f) so the kernel consumes x.reshape(B, S*F),
      * zero-pad every weight/bias to lane-dense (mult-of-128) / full-vreg tiles,
      * cast padded weights to bf16 (f32 accumulation happens in the kernel).
    """
    _, seq_len, feat_dim = input_shape

    (w0, b0) = params[0]
    dout0 = w0.shape[1]
    w0 = (w0.reshape(feat_dim, seq_len, dout0)
            .transpose(1, 0, 2)
            .reshape(feat_dim * seq_len, dout0))
    folded = [(w0, b0)] + list(params[1:])

    din0 = seq_len * feat_dim
    din0_pad = _round_up(din0, _LANE)

    weights, biases, real_dims = [], [], []
    in_pad = din0_pad
    for (w, b) in folded:
        d_in, d_out = w.shape
        d_out_pad = _round_up(d_out, _LANE)
        wp = jnp.zeros((in_pad, d_out_pad), jnp.float32).at[:d_in, :d_out].set(w)
        weights.append(wp.astype(jnp.bfloat16))
        bp = jnp.zeros((_SUBLANE, d_out_pad), jnp.float32).at[:, :d_out].set(
            jnp.broadcast_to(b, (_SUBLANE, d_out)))
        biases.append(bp)
        real_dims.append((d_in, d_out))
        in_pad = d_out_pad

    return {
        "weights": weights,          # bf16, padded, persistent
        "biases": biases,            # f32, (8, dout_p), persistent
        "real_dims": real_dims,      # unpadded (din, dout) per layer
        "din0": din0,
        "din0_pad": din0_pad,
        "out_pad": in_pad,
        "class_size": class_size,
        "n_layers": len(folded),
    }


# ----------------------------- Forward wrapper ------------------------------

def mlp_forward(prep, x):
    """x: (B, S, F) f32.  prep: output of prepare_mlp_params (padded bf16 weights)."""
    B, S, F = x.shape
    din0 = prep["din0"]
    din0_pad = prep["din0_pad"]
    out_pad = prep["out_pad"]
    n_layers = prep["n_layers"]
    class_size = prep["class_size"]
    apply_softmax = class_size > 1

    assert S * F == din0

    # Per-call work: only pad x (flatten, no transpose -- folded into w0).
    h = x.reshape(B, S * F)
    Bp8 = _round_up(B, _SUBLANE)
    tile_b = min(256, Bp8)
    Bp = _round_up(Bp8, tile_b)
    x_pad = jnp.zeros((Bp, din0_pad), jnp.float32).at[:B, :din0].set(h)

    # Specs: x/out tiled over batch rows; weights/biases constant (VMEM-resident).
    in_specs = [pl.BlockSpec((tile_b, din0_pad), lambda i: (i, 0))]
    flat_params = []
    for w, b in zip(prep["weights"], prep["biases"]):
        flat_params += [w, b]
        in_specs.append(pl.BlockSpec(w.shape, lambda i: (0, 0)))
        in_specs.append(pl.BlockSpec(b.shape, lambda i: (0, 0)))
    out_spec = pl.BlockSpec((tile_b, out_pad), lambda i: (i, 0))

    # Cost estimate from REAL (unpadded) dims.
    flops = sum(2 * B * din * dout for (din, dout) in prep["real_dims"])
    bytes_accessed = B * din0 * 4 + B * class_size * 4
    bytes_accessed += sum(din * dout * 2 + dout * 4 for (din, dout) in prep["real_dims"])
    transcendentals = B * class_size if apply_softmax else 0

    # VMEM budget from the actual padded footprint (+ activation/double-buffer headroom).
    w_bytes = sum(int(w.size) * 2 for w in prep["weights"])
    b_bytes = sum(int(b.size) * 4 for b in prep["biases"])
    max_width = max([din0_pad] + [w.shape[1] for w in prep["weights"]])
    needed = (w_bytes + b_bytes
              + 2 * tile_b * din0_pad * 4          # double-buffered x tile
              + 2 * tile_b * out_pad * 4           # double-buffered out tile
              + 6 * tile_b * max_width * 4)        # live activation headroom
    vmem_limit = int(min(100 * 1024 * 1024, max(8 * 1024 * 1024, 2 * needed)))

    kernel = functools.partial(_mlp_fused_kernel, n_layers=n_layers,
                               class_size=class_size, apply_softmax=apply_softmax)

    out = pl.pallas_call(
        kernel,
        out_shape=jax.ShapeDtypeStruct((Bp, out_pad), jnp.float32),
        grid=(Bp // tile_b,),
        in_specs=in_specs,
        out_specs=out_spec,
        compiler_params=pltpu.CompilerParams(
            dimension_semantics=("parallel",),
            vmem_limit_bytes=vmem_limit),
        cost_estimate=pl.CostEstimate(
            flops=flops,
            transcendentals=transcendentals,
            bytes_accessed=bytes_accessed),
    )(x_pad, *flat_params)

    return out[:B, :class_size]


# ------------------------- Pure-JAX references ------------------------------

def reference_forward_f32(params, x, class_size):
    """Mirrors MLP.forward exactly in f32: transpose(1,2) -> Flatten -> FC stack."""
    B = x.shape[0]
    h = jnp.transpose(x, (0, 2, 1)).reshape(B, -1)
    n = len(params)
    for i, (w, b) in enumerate(params):
        h = h @ w + b
        if i < n - 1:
            h = jnp.maximum(h, 0.0)
    if class_size > 1:
        h = jax.nn.softmax(h, axis=1)
    return h


def reference_forward_bf16(params, x, class_size):
    """Same forward, with bf16 matmul operands / f32 accumulation (kernel-matched)."""
    B = x.shape[0]
    h = jnp.transpose(x, (0, 2, 1)).reshape(B, -1)
    n = len(params)
    for i, (w, b) in enumerate(params):
        h = jnp.dot(h.astype(jnp.bfloat16), w.astype(jnp.bfloat16),
                    preferred_element_type=jnp.float32) + b
        if i < n - 1:
            h = jnp.maximum(h, 0.0)
    if class_size > 1:
        h = jax.nn.softmax(h, axis=1)
    return h


# --------------------------------- Main ------------------------------------

if __name__ == "__main__":
    # input_shape = (batchsize, sequence length, feature dimensions)
    batch, seq_len, feat_dim = 2, 8, 16
    input_shape = (batch, seq_len, feat_dim)
    fc_sizes = [32, 32]
    class_size = 4
    droprate = 0.5  # unused at inference (eval-mode dropout == identity)

    key = jax.random.PRNGKey(0)
    key, kx = jax.random.split(key)
    x = jax.random.normal(kx, (batch, seq_len, feat_dim), jnp.float32)

    params = init_mlp_params(key, input_shape, class_size, fc_sizes)
    prep = prepare_mlp_params(params, input_shape, class_size)   # one-time prep

    out = mlp_forward(prep, x)
    out = jax.block_until_ready(out)

    assert out.shape == (batch, class_size)
    # Exact softmax -> rows sum to 1.
    assert jnp.allclose(jnp.sum(out, axis=1), 1.0, atol=1e-5)
    # Tight check vs a bf16-matmul-matched reference.
    ref_bf16 = reference_forward_bf16(params, x, class_size)
    assert jnp.allclose(out, ref_bf16, atol=5e-4, rtol=5e-4)
    # Loose check vs the full-f32 PyTorch-equivalent reference (bf16 quantization).
    ref_f32 = reference_forward_f32(params, x, class_size)
    assert jnp.allclose(out, ref_f32, atol=2e-2, rtol=2e-2)

    # Larger batch exercises the multi-tile parallel grid (2 row tiles of 256).
    big_b = 512
    key, kx2 = jax.random.split(key)
    x_big = jax.random.normal(kx2, (big_b, seq_len, feat_dim), jnp.float32)
    out_big = jax.block_until_ready(mlp_forward(prep, x_big))
    assert out_big.shape == (big_b, class_size)
    assert jnp.allclose(jnp.sum(out_big, axis=1), 1.0, atol=1e-5)
    ref_big = reference_forward_bf16(params, x_big, class_size)
    assert jnp.allclose(out_big, ref_big, atol=5e-4, rtol=5e-4)

    print("KERNEL_OK")
</pallas_src>

<mosaic_0001>
module attributes {stable_mosaic.version = 11 : i64} {
  func.func @_mlp_fused_kernel(%arg0: i32, %arg1: memref<8x128xf32, #tpu.memory_space<vmem>>, %arg2: memref<128x128xbf16, #tpu.memory_space<vmem>>, %arg3: memref<8x128xf32, #tpu.memory_space<vmem>>, %arg4: memref<128x128xbf16, #tpu.memory_space<vmem>>, %arg5: memref<8x128xf32, #tpu.memory_space<vmem>>, %arg6: memref<128x128xbf16, #tpu.memory_space<vmem>>, %arg7: memref<8x128xf32, #tpu.memory_space<vmem>>, %arg8: memref<8x128xf32, #tpu.memory_space<vmem>>) attributes {dimension_semantics = [#tpu.dimension_semantics<parallel>], iteration_bounds = array<i64: 1>, scalar_prefetch = 0 : i64, scratch_operands = 0 : i64, tpu.core_type = #tpu.core_type<tc>, window_params = [{transform_indices = @transform_0, window_bounds = array<i64: 8, 128>}, {pipeline_mode = #tpu.pipeline_mode<synchronous>, transform_indices = @transform_1, window_bounds = array<i64: 128, 128>}, {pipeline_mode = #tpu.pipeline_mode<synchronous>, transform_indices = @transform_2, window_bounds = array<i64: 8, 128>}, {pipeline_mode = #tpu.pipeline_mode<synchronous>, transform_indices = @transform_3, window_bounds = array<i64: 128, 128>}, {pipeline_mode = #tpu.pipeline_mode<synchronous>, transform_indices = @transform_4, window_bounds = array<i64: 8, 128>}, {pipeline_mode = #tpu.pipeline_mode<synchronous>, transform_indices = @transform_5, window_bounds = array<i64: 128, 128>}, {pipeline_mode = #tpu.pipeline_mode<synchronous>, transform_indices = @transform_6, window_bounds = array<i64: 8, 128>}, {transform_indices = @transform_7, window_bounds = array<i64: 8, 128>}]} {
    %c0 = arith.constant 0 : index
    %c0_0 = arith.constant 0 : index
    %0 = vector.load %arg1[%c0, %c0_0] : memref<8x128xf32, #tpu.memory_space<vmem>>, vector<8x128xf32>
    %c0_1 = arith.constant 0 : index
    %c0_2 = arith.constant 0 : index
    %1 = vector.load %arg2[%c0_1, %c0_2] : memref<128x128xbf16, #tpu.memory_space<vmem>>, vector<128x128xbf16>
    %c0_3 = arith.constant 0 : index
    %c0_4 = arith.constant 0 : index
    %2 = vector.load %arg3[%c0_3, %c0_4] : memref<8x128xf32, #tpu.memory_space<vmem>>, vector<8x128xf32>
    %3 = arith.truncf %0 : vector<8x128xf32> to vector<8x128xbf16>
    %cst = arith.constant dense<0.000000e+00> : vector<8x128xf32>
    %4 = tpu.matmul %3, %1, %cst {dimension_numbers = #tpu.dot_dimension_numbers<[1], [0], [0], [1], [0, 0, 1, 1], [], []>} : vector<8x128xbf16>, vector<128x128xbf16>, vector<8x128xf32> -> vector<8x128xf32>
    %5 = vector.extract_strided_slice %2 {offsets = [0, 0], sizes = [1, 128], strides = [1, 1]} : vector<8x128xf32> to vector<1x128xf32>
    %6 = vector.broadcast %5 : vector<1x128xf32> to vector<8x128xf32>
    %7 = arith.addf %4, %6 : vector<8x128xf32>
    %cst_5 = arith.constant 0.000000e+00 : f32
    %8 = vector.broadcast %cst_5 : f32 to vector<8x128xf32>
    %9 = arith.maximumf %7, %8 : vector<8x128xf32>
    %c0_6 = arith.constant 0 : index
    %c0_7 = arith.constant 0 : index
    %10 = vector.load %arg4[%c0_6, %c0_7] : memref<128x128xbf16, #tpu.memory_space<vmem>>, vector<128x128xbf16>
    %c0_8 = arith.constant 0 : index
    %c0_9 = arith.constant 0 : index
    %11 = vector.load %arg5[%c0_8, %c0_9] : memref<8x128xf32, #tpu.memory_space<vmem>>, vector<8x128xf32>
    %12 = arith.truncf %9 : vector<8x128xf32> to vector<8x128xbf16>
    %cst_10 = arith.constant dense<0.000000e+00> : vector<8x128xf32>
    %13 = tpu.matmul %12, %10, %cst_10 {dimension_numbers = #tpu.dot_dimension_numbers<[1], [0], [0], [1], [0, 0, 1, 1], [], []>} : vector<8x128xbf16>, vector<128x128xbf16>, vector<8x128xf32> -> vector<8x128xf32>
    %14 = vector.extract_strided_slice %11 {offsets = [0, 0], sizes = [1, 128], strides = [1, 1]} : vector<8x128xf32> to vector<1x128xf32>
    %15 = vector.broadcast %14 : vector<1x128xf32> to vector<8x128xf32>
    %16 = arith.addf %13, %15 : vector<8x128xf32>
    %cst_11 = arith.constant 0.000000e+00 : f32
    %17 = vector.broadcast %cst_11 : f32 to vector<8x128xf32>
    %18 = arith.maximumf %16, %17 : vector<8x128xf32>
    %c0_12 = arith.constant 0 : index
    %c0_13 = arith.constant 0 : index
    %19 = vector.load %arg6[%c0_12, %c0_13] : memref<128x128xbf16, #tpu.memory_space<vmem>>, vector<128x128xbf16>
    %c0_14 = arith.constant 0 : index
    %c0_15 = arith.constant 0 : index
    %20 = vector.load %arg7[%c0_14, %c0_15] : memref<8x128xf32, #tpu.memory_space<vmem>>, vector<8x128xf32>
    %21 = arith.truncf %18 : vector<8x128xf32> to vector<8x128xbf16>
    %cst_16 = arith.constant dense<0.000000e+00> : vector<8x128xf32>
    %22 = tpu.matmul %21, %19, %cst_16 {dimension_numbers = #tpu.dot_dimension_numbers<[1], [0], [0], [1], [0, 0, 1, 1], [], []>} : vector<8x128xbf16>, vector<128x128xbf16>, vector<8x128xf32> -> vector<8x128xf32>
    %23 = vector.extract_strided_slice %20 {offsets = [0, 0], sizes = [1, 128], strides = [1, 1]} : vector<8x128xf32> to vector<1x128xf32>
    %24 = vector.broadcast %23 : vector<1x128xf32> to vector<8x128xf32>
    %25 = arith.addf %22, %24 : vector<8x128xf32>
    %26 = tpu.iota {dimensions = array<i32: 1>} : vector<8x128xi32>
    %c4_i32 = arith.constant 4 : i32
    %27 = vector.broadcast %c4_i32 : i32 to vector<8x128xi32>
    %28 = arith.cmpi slt, %26, %27 : vector<8x128xi32>
    %cst_17 = arith.constant -1.000000e+30 : f32
    %29 = vector.broadcast %cst_17 : f32 to vector<8x128xf32>
    %30 = arith.select %28, %25, %29 : vector<8x128xi1>, vector<8x128xf32>
    %cst_18 = arith.constant dense<0xFF800000> : vector<8xf32>
    %31 = vector.multi_reduction <maximumf>, %30, %cst_18 [1] : vector<8x128xf32> to vector<8xf32>
    %32 = vector.shape_cast %31 : vector<8xf32> to vector<8x1xf32>
    %33 = vector.broadcast %32 : vector<8x1xf32> to vector<8x128xf32>
    %34 = arith.subf %30, %33 : vector<8x128xf32>
    %35 = math.exp %34 : vector<8x128xf32>
    %cst_19 = arith.constant dense<0.000000e+00> : vector<8xf32>
    %36 = vector.multi_reduction <add>, %35, %cst_19 [1] : vector<8x128xf32> to vector<8xf32>
    %37 = vector.shape_cast %36 : vector<8xf32> to vector<8x1xf32>
    %38 = vector.broadcast %37 : vector<8x1xf32> to vector<8x128xf32>
    %39 = arith.divf %35, %38 : vector<8x128xf32>
    %c0_20 = arith.constant 0 : index
    %c0_21 = arith.constant 0 : index
    %40 = vector.load %arg8[%c0_20, %c0_21] : memref<8x128xf32, #tpu.memory_space<vmem>>, vector<8x128xf32>
    tpu.vector_store %arg8[%c0_20, %c0_21], %39 {strides = array<i32>} : memref<8x128xf32, #tpu.memory_space<vmem>>, vector<8x128xf32>,
    return
  }
  func.func @transform_0(%arg0: i32) -> (i32, i32) {
    %c0_i32 = arith.constant 0 : i32
    %c0_i32_0 = arith.constant 0 : i32
    return %arg0, %c0_i32 : i32, i32
  }
  func.func @transform_1(%arg0: i32) -> (i32, i32) {
    %c0_i32 = arith.constant 0 : i32
    %c0_i32_0 = arith.constant 0 : i32
    %c0_i32_1 = arith.constant 0 : i32
    return %c0_i32, %c0_i32_0 : i32, i32
  }
  func.func @transform_2(%arg0: i32) -> (i32, i32) {
    %c0_i32 = arith.constant 0 : i32
    %c0_i32_0 = arith.constant 0 : i32
    %c0_i32_1 = arith.constant 0 : i32
    return %c0_i32, %c0_i32_0 : i32, i32
  }
  func.func @transform_3(%arg0: i32) -> (i32, i32) {
    %c0_i32 = arith.constant 0 : i32
    %c0_i32_0 = arith.constant 0 : i32
    %c0_i32_1 = arith.constant 0 : i32
    return %c0_i32, %c0_i32_0 : i32, i32
  }
  func.func @transform_4(%arg0: i32) -> (i32, i32) {
    %c0_i32 = arith.constant 0 : i32
    %c0_i32_0 = arith.constant 0 : i32
    %c0_i32_1 = arith.constant 0 : i32
    return %c0_i32, %c0_i32_0 : i32, i32
  }
  func.func @transform_5(%arg0: i32) -> (i32, i32) {
    %c0_i32 = arith.constant 0 : i32
    %c0_i32_0 = arith.constant 0 : i32
    %c0_i32_1 = arith.constant 0 : i32
    return %c0_i32, %c0_i32_0 : i32, i32
  }
  func.func @transform_6(%arg0: i32) -> (i32, i32) {
    %c0_i32 = arith.constant 0 : i32
    %c0_i32_0 = arith.constant 0 : i32
    %c0_i32_1 = arith.constant 0 : i32
    return %c0_i32, %c0_i32_0 : i32, i32
  }
  func.func @transform_7(%arg0: i32) -> (i32, i32) {
    %c0_i32 = arith.constant 0 : i32
    %c0_i32_0 = arith.constant 0 : i32
    return %arg0, %c0_i32 : i32, i32
  }
}

</mosaic_0001>

<llo_original>
// kernel: tpu_custom_call.1
$region0: #{tpu_custom_call.1}
  #allocation0 [shape = 'u32[]', space=smem, size = 0x4, offset = 0x4, fixed_abs, tag = 'smem constant byte address 0x4 - core index']
  #allocation1 [shape = 'u32[144,128]{1,0:T(1,128)}', space=vmem, size = 0x12000, scoped, tag = 'internal scratch']
  %s0 = inlined_call_operand.hbm [shape: f32[8,128], index: 0, kind: input, shape index: {}]
  %s1 = inlined_call_operand.hbm [shape: bf16[128,128], index: 1, kind: input, shape index: {}]
  %s2 = inlined_call_operand.hbm [shape: f32[8,128], index: 2, kind: input, shape index: {}]
  %s3 = inlined_call_operand.hbm [shape: bf16[128,128], index: 3, kind: input, shape index: {}]
  %s4 = inlined_call_operand.vmem [shape: f32[8,128], index: 4, kind: input, shape index: {}]
  %s5 = inlined_call_operand.hbm [shape: bf16[128,128], index: 5, kind: input, shape index: {}]
  %s6 = inlined_call_operand.vmem [shape: f32[8,128], index: 6, kind: input, shape index: {}]
  %s7 = inlined_call_operand.hbm [shape: f32[8,128], index: 7, kind: output, shape index: {}]
  %s8 = sld [smem:[#allocation0]]
  $region58: #{tpu_custom_call.1} parent=0
    _
  %s10 = ssub.s32 1, %s8
  %s11 = scalar_select 0, %s10, %s8
  $region1: #{tpu_custom_call.1} parent=0
    #allocation2 [shape = 'u8[4096]{0}', space=vmem, size = 0x1000, scoped, tag = 'input window, operand 0, single buffered']
    #allocation3 [shape = 's32[1]{0}', space=sflag, size = 0x4, scoped, tag = 'scoped memory for tpu_custom_call.1']
    #allocation4 [shape = 's32[1]{0}', space=sflag, size = 0x4, scoped, tag = 'scoped memory for tpu_custom_call.1']
    #allocation5 [shape = 'u8[32768]{0}', space=vmem, size = 0x8000, scoped, tag = 'input window, operand 1, single buffered']
    #allocation6 [shape = 's32[1]{0}', space=sflag, size = 0x4, scoped, tag = 'scoped memory for tpu_custom_call.1']
    #allocation7 [shape = 'u8[4096]{0}', space=vmem, size = 0x1000, scoped, tag = 'input window, operand 2, single buffered']
    #allocation8 [shape = 'u8[32768]{0}', space=vmem, size = 0x8000, scoped, tag = 'input window, operand 3, single buffered']
    #allocation9 [shape = 's32[1]{0}', space=sflag, size = 0x4, scoped, tag = 'scoped memory for tpu_custom_call.1']
    #allocation10 [shape = 'u8[32768]{0}', space=vmem, size = 0x8000, scoped, tag = 'input window, operand 5, single buffered']
    #allocation11 [shape = 'u8[4096]{0}', space=vmem, size = 0x1000, scoped, tag = 'output window, operand 0, single buffered']
    %12 = vsyncpa [#allocation3], 0
    %13 = vsyncpa [#allocation6], 0
    %14 = vsyncpa [#allocation9], 0
    %15 = vsyncpa [#allocation4], 0
    // Predicated region
    $region2: #{tpu_custom_call.1} parent=1 // pred_check
      _
    $region3: #{tpu_custom_call.1} parent=1 // pred_check_branch
      %17 = sbr.rel (0) target = $region5
    $region4: #{tpu_custom_call.1} parent=1 // pred_region
      %s19 = ssub.s32 128, 128
      %20 = vsyncadd [#allocation3], %s19
      %s22 = sshll.u32 [#allocation2], 4
      %s23 = int_to_ptr.vmem [resolvable:$true] %s22
      %25 = dma.hbm_to_vmem [thread:$0]  %s0, 128, %s23, [#allocation3]
    $region5: #{tpu_custom_call.1} parent=1 // pred_fallthru
      _
    // Predicated region
    $region6: #{tpu_custom_call.1} parent=1 // pred_check
      _
    $region7: #{tpu_custom_call.1} parent=1 // pred_check_branch
      %27 = sbr.rel (0) target = $region9
    $region8: #{tpu_custom_call.1} parent=1 // pred_region
      %s29 = ssub.s32 1024, 1024
      %30 = vsyncadd [#allocation6], %s29
      %s31 = sshll.u32 [#allocation5], 4
      %s32 = int_to_ptr.vmem [resolvable:$true] %s31
      %37 = dma.hbm_to_vmem [thread:$0]  %s1, 1024, %s32, [#allocation6], 64, 64, 4
    $region9: #{tpu_custom_call.1} parent=1 // pred_fallthru
      _
    // Predicated region
    $region10: #{tpu_custom_call.1} parent=1 // pred_check
      _
    $region11: #{tpu_custom_call.1} parent=1 // pred_check_branch
      %39 = sbr.rel (0) target = $region13
    $region12: #{tpu_custom_call.1} parent=1 // pred_region
      %s41 = ssub.s32 128, 128
      %42 = vsyncadd [#allocation6], %s41
      %s44 = sshll.u32 [#allocation7], 4
      %s45 = int_to_ptr.vmem [resolvable:$true] %s44
      %47 = dma.hbm_to_vmem [thread:$0]  %s2, 128, %s45, [#allocation6]
    $region13: #{tpu_custom_call.1} parent=1 // pred_fallthru
      _
    // Predicated region
    $region14: #{tpu_custom_call.1} parent=1 // pred_check
      _
    $region15: #{tpu_custom_call.1} parent=1 // pred_check_branch
      %49 = sbr.rel (0) target = $region17
    $region16: #{tpu_custom_call.1} parent=1 // pred_region
      %s51 = ssub.s32 1024, 1024
      %52 = vsyncadd [#allocation9], %s51
      %s53 = sshll.u32 [#allocation8], 4
      %s54 = int_to_ptr.vmem [resolvable:$true] %s53
      %59 = dma.hbm_to_vmem [thread:$0]  %s3, 1024, %s54, [#allocation9], 64, 64, 4
    $region17: #{tpu_custom_call.1} parent=1 // pred_fallthru
      _
    // Predicated region
    $region18: #{tpu_custom_call.1} parent=1 // pred_check
      _
    $region19: #{tpu_custom_call.1} parent=1 // pred_check_branch
      %61 = sbr.rel (0) target = $region21
    $region20: #{tpu_custom_call.1} parent=1 // pred_region
      _
    $region21: #{tpu_custom_call.1} parent=1 // pred_fallthru
      _
    // Predicated region
    $region22: #{tpu_custom_call.1} parent=1 // pred_check
      _
    $region23: #{tpu_custom_call.1} parent=1 // pred_check_branch
      %63 = sbr.rel (0) target = $region25
    $region24: #{tpu_custom_call.1} parent=1 // pred_region
      %s65 = ssub.s32 1024, 1024
      %66 = vsyncadd [#allocation9], %s65
      %s67 = sshll.u32 [#allocation10], 4
      %s68 = int_to_ptr.vmem [resolvable:$true] %s67
      %73 = dma.hbm_to_vmem [thread:$0]  %s5, 1024, %s68, [#allocation9], 64, 64, 4
    $region25: #{tpu_custom_call.1} parent=1 // pred_fallthru
      _
    // Predicated region
    $region26: #{tpu_custom_call.1} parent=1 // pred_check
      _
    $region27: #{tpu_custom_call.1} parent=1 // pred_check_branch
      %75 = sbr.rel (0) target = $region29
    $region28: #{tpu_custom_call.1} parent=1 // pred_region
      _
    $region29: #{tpu_custom_call.1} parent=1 // pred_fallthru
      _
    // Predicated region
    $region30: #{tpu_custom_call.1} parent=1 // pred_check
      _
    $region31: #{tpu_custom_call.1} parent=1 // pred_check_branch
      %77 = sbr.rel (0) target = $region33
    $region32: #{tpu_custom_call.1} parent=1 // pred_region
      %78 = dma.done [#allocation3], 128
    $region33: #{tpu_custom_call.1} parent=1 // pred_fallthru
      _
    // Predicated region
    $region34: #{tpu_custom_call.1} parent=1 // pred_check
      _
    $region35: #{tpu_custom_call.1} parent=1 // pred_check_branch
      %80 = sbr.rel (0) target = $region37
    $region36: #{tpu_custom_call.1} parent=1 // pred_region
      %81 = dma.done [#allocation6], 1024
    $region37: #{tpu_custom_call.1} parent=1 // pred_fallthru
      _
    // Predicated region
    $region38: #{tpu_custom_call.1} parent=1 // pred_check
      _
    $region39: #{tpu_custom_call.1} parent=1 // pred_check_branch
      %83 = sbr.rel (0) target = $region41
    $region40: #{tpu_custom_call.1} parent=1 // pred_region
      %84 = dma.done [#allocation6], 128
    $region41: #{tpu_custom_call.1} parent=1 // pred_fallthru
      _
    // Predicated region
    $region42: #{tpu_custom_call.1} parent=1 // pred_check
      _
    $region43: #{tpu_custom_call.1} parent=1 // pred_check_branch
      %86 = sbr.rel (0) target = $region45
    $region44: #{tpu_custom_call.1} parent=1 // pred_region
      %87 = dma.done [#allocation9], 1024
    $region45: #{tpu_custom_call.1} parent=1 // pred_fallthru
      _
    // Predicated region
    $region46: #{tpu_custom_call.1} parent=1 // pred_check
      _
    $region47: #{tpu_custom_call.1} parent=1 // pred_check_branch
      %89 = sbr.rel (0) target = $region49
    $region48: #{tpu_custom_call.1} parent=1 // pred_region
      %90 = dma.done [#allocation9], 1024
    $region49: #{tpu_custom_call.1} parent=1 // pred_fallthru
      _
    %v92 = vld [vmem:[#allocation2] sm:$0xff]
    %v93 = vld [vmem:[#allocation5] sm:$0xf]
    %v94 = vld [vmem:[#allocation5 + $0x4] sm:$0xf]
    %v95 = vld [vmem:[#allocation5 + $0x8] sm:$0xf]
    %v96 = vld [vmem:[#allocation5 + $0xc] sm:$0xf]
    %v97 = vld [vmem:[#allocation5 + $0x10] sm:$0xf]
    %v98 = vld [vmem:[#allocation5 + $0x14] sm:$0xf]
    %v99 = vld [vmem:[#allocation5 + $0x18] sm:$0xf]
    %v100 = vld [vmem:[#allocation5 + $0x1c] sm:$0xf]
    %v101 = vld [vmem:[#allocation5 + $0x20] sm:$0xf]
    %v102 = vld [vmem:[#allocation5 + $0x24] sm:$0xf]
    %v103 = vld [vmem:[#allocation5 + $0x28] sm:$0xf]
    %v104 = vld [vmem:[#allocation5 + $0x2c] sm:$0xf]
    %v105 = vld [vmem:[#allocation5 + $0x30] sm:$0xf]
    %v106 = vld [vmem:[#allocation5 + $0x34] sm:$0xf]
    %v107 = vld [vmem:[#allocation5 + $0x38] sm:$0xf]
    %v108 = vld [vmem:[#allocation5 + $0x3c] sm:$0xf]
    %v109 = vld [vmem:[#allocation7] sm:$0xff]
    %v110 = vpack.c.bf16 %v92, %v92
    %v111 = vlaneseq
    %v112 = vshrl.u32 %v111, 7
    %v113 = vsub.s32 0, %v112
    %v114 = vrot.slane %v109, %v113
    %v131 = vunpack.c.l.b16 %v93
    %v132 = vunpack.c.l.b16 %v94
    %v133 = vunpack.c.l.b16 %v95
    %v134 = vunpack.c.l.b16 %v96
    %v135 = vunpack.c.l.b16 %v97
    %v136 = vunpack.c.l.b16 %v98
    %v137 = vunpack.c.l.b16 %v99
    %v138 = vunpack.c.l.b16 %v100
    %v139 = vunpack.c.l.b16 %v101
    %v140 = vunpack.c.l.b16 %v102
    %v141 = vunpack.c.l.b16 %v103
    %v142 = vunpack.c.l.b16 %v104
    %v143 = vunpack.c.l.b16 %v105
    %v144 = vunpack.c.l.b16 %v106
    %v145 = vunpack.c.l.b16 %v107
    %v146 = vunpack.c.l.b16 %v108
    %v147 = vpack.c.b16 %v132, %v131
    %v148 = vpack.c.b16 %v134, %v133
    %v149 = vpack.c.b16 %v136, %v135
    %v150 = vpack.c.b16 %v138, %v137
    %v151 = vpack.c.b16 %v140, %v139
    %v152 = vpack.c.b16 %v142, %v141
    %v153 = vpack.c.b16 %v144, %v143
    %v154 = vpack.c.b16 %v146, %v145
    %163 = vmatprep.subr.bf16.mxu0 0
    %164 = vmatpush1.bf16.msra.mxu0 %v147
    %165 = vmatprep.subr.bf16.mxu0 0
    %166 = vmatpush1.bf16.msra.mxu0 %v148
    %167 = vmatprep.subr.bf16.mxu0 0
    %168 = vmatpush1.bf16.msra.mxu0 %v149
    %169 = vmatprep.subr.bf16.mxu0 0
    %170 = vmatpush1.bf16.msra.mxu0 %v150
    %171 = vmatprep.subr.bf16.mxu0 0
    %172 = vmatpush1.bf16.msra.mxu0 %v151
    %173 = vmatprep.subr.bf16.mxu0 0
    %174 = vmatpush1.bf16.msra.mxu0 %v152
    %175 = vmatprep.subr.bf16.mxu0 0
    %176 = vmatpush1.bf16.msra.mxu0 %v153
    %177 = vmatprep.subr.bf16.mxu0 0
    %178 = vmatpush1.bf16.msra.mxu0 %v154
    %179 = vmatprep.subr.bf16.mxu0 0
    %180 = vmatpush1.bf16.msra.mxu0 0
    %181 = vmatprep.subr.bf16.mxu0 0
    %182 = vmatpush1.bf16.msra.mxu0 0
    %183 = vmatprep.subr.bf16.mxu0 0
    %184 = vmatpush1.bf16.msra.mxu0 0
    %185 = vmatprep.subr.bf16.mxu0 0
    %186 = vmatpush1.bf16.msra.mxu0 0
    %187 = vmatprep.subr.bf16.mxu0 0
    %188 = vmatpush1.bf16.msra.mxu0 0
    %189 = vmatprep.subr.bf16.mxu0 0
    %190 = vmatpush1.bf16.msra.mxu0 0
    %191 = vmatprep.subr.bf16.mxu0 0
    %192 = vmatpush1.bf16.msra.mxu0 0
    %193 = vmatprep.subr.bf16.mxu0 0
    %194 = vmatpush1.bf16.msra.mxu0 0
    %195 = vmatprep.mubr.bf16.mxu0 0
    %196 = vmatmul.mubr.bf16.gmra.mrb[0].mxu0 %v110
    %v197 = vpop.f32.mrb[0].mxu0
    %v198 = vadd.f32 %v114, %v197
    %v199 = vpop.f32.mrb[0].mxu0
    %v200 = vpop.f32.mrb[0].mxu0
    %v201 = vpop.f32.mrb[0].mxu0
    %202 = vdwg.mxu0
    %v203 = vmax.f32 %v198, 0.0
    %v204 = vld [vmem:[#allocation8] sm:$0xf]
    %v205 = vld [vmem:[#allocation8 + $0x4] sm:$0xf]
    %v206 = vld [vmem:[#allocation8 + $0x8] sm:$0xf]
    %v207 = vld [vmem:[#allocation8 + $0xc] sm:$0xf]
    %v208 = vld [vmem:[#allocation8 + $0x10] sm:$0xf]
    %v209 = vld [vmem:[#allocation8 + $0x14] sm:$0xf]
    %v210 = vld [vmem:[#allocation8 + $0x18] sm:$0xf]
    %v211 = vld [vmem:[#allocation8 + $0x1c] sm:$0xf]
    %v212 = vld [vmem:[#allocation8 + $0x20] sm:$0xf]
    %v213 = vld [vmem:[#allocation8 + $0x24] sm:$0xf]
    %v214 = vld [vmem:[#allocation8 + $0x28] sm:$0xf]
    %v215 = vld [vmem:[#allocation8 + $0x2c] sm:$0xf]
    %v216 = vld [vmem:[#allocation8 + $0x30] sm:$0xf]
    %v217 = vld [vmem:[#allocation8 + $0x34] sm:$0xf]
    %v218 = vld [vmem:[#allocation8 + $0x38] sm:$0xf]
    %v219 = vld [vmem:[#allocation8 + $0x3c] sm:$0xf]
    %v220 = vld [vmem:[%s4] sm:$0xff]
    %v221 = vpack.c.bf16 %v203, %v203
    %v222 = vlaneseq
    %v223 = vshrl.u32 %v222, 7
    %v224 = vsub.s32 0, %v223
    %v225 = vrot.slane %v220, %v224
    %v242 = vunpack.c.l.b16 %v204
    %v243 = vunpack.c.l.b16 %v205
    %v244 = vunpack.c.l.b16 %v206
    %v245 = vunpack.c.l.b16 %v207
    %v246 = vunpack.c.l.b16 %v208
    %v247 = vunpack.c.l.b16 %v209
    %v248 = vunpack.c.l.b16 %v210
    %v249 = vunpack.c.l.b16 %v211
    %v250 = vunpack.c.l.b16 %v212
    %v251 = vunpack.c.l.b16 %v213
    %v252 = vunpack.c.l.b16 %v214
    %v253 = vunpack.c.l.b16 %v215
    %v254 = vunpack.c.l.b16 %v216
    %v255 = vunpack.c.l.b16 %v217
    %v256 = vunpack.c.l.b16 %v218
    %v257 = vunpack.c.l.b16 %v219
    %v258 = vpack.c.b16 %v243, %v242
    %v259 = vpack.c.b16 %v245, %v244
    %v260 = vpack.c.b16 %v247, %v246
    %v261 = vpack.c.b16 %v249, %v248
    %v262 = vpack.c.b16 %v251, %v250
    %v263 = vpack.c.b16 %v253, %v252
    %v264 = vpack.c.b16 %v255, %v254
    %v265 = vpack.c.b16 %v257, %v256
    %274 = vmatprep.subr.bf16.mxu0 0
    %275 = vmatpush1.bf16.msra.mxu0 %v258
    %276 = vmatprep.subr.bf16.mxu0 0
    %277 = vmatpush1.bf16.msra.mxu0 %v259
    %278 = vmatprep.subr.bf16.mxu0 0
    %279 = vmatpush1.bf16.msra.mxu0 %v260
    %280 = vmatprep.subr.bf16.mxu0 0
    %281 = vmatpush1.bf16.msra.mxu0 %v261
    %282 = vmatprep.subr.bf16.mxu0 0
    %283 = vmatpush1.bf16.msra.mxu0 %v262
    %284 = vmatprep.subr.bf16.mxu0 0
    %285 = vmatpush1.bf16.msra.mxu0 %v263
    %286 = vmatprep.subr.bf16.mxu0 0
    %287 = vmatpush1.bf16.msra.mxu0 %v264
    %288 = vmatprep.subr.bf16.mxu0 0
    %289 = vmatpush1.bf16.msra.mxu0 %v265
    %290 = vmatprep.subr.bf16.mxu0 0
    %291 = vmatpush1.bf16.msra.mxu0 0
    %292 = vmatprep.subr.bf16.mxu0 0
    %293 = vmatpush1.bf16.msra.mxu0 0
    %294 = vmatprep.subr.bf16.mxu0 0
    %295 = vmatpush1.bf16.msra.mxu0 0
    %296 = vmatprep.subr.bf16.mxu0 0
    %297 = vmatpush1.bf16.msra.mxu0 0
    %298 = vmatprep.subr.bf16.mxu0 0
    %299 = vmatpush1.bf16.msra.mxu0 0
    %300 = vmatprep.subr.bf16.mxu0 0
    %301 = vmatpush1.bf16.msra.mxu0 0
    %302 = vmatprep.subr.bf16.mxu0 0
    %303 = vmatpush1.bf16.msra.mxu0 0
    %304 = vmatprep.subr.bf16.mxu0 0
    %305 = vmatpush1.bf16.msra.mxu0 0
    %306 = vmatprep.mubr.bf16.mxu0 0
    %307 = vmatmul.mubr.bf16.gmra.mrb[0].mxu0 %v221
    %v308 = vpop.f32.mrb[0].mxu0
    %v309 = vadd.f32 %v225, %v308
    %v310 = vpop.f32.mrb[0].mxu0
    %v311 = vpop.f32.mrb[0].mxu0
    %v312 = vpop.f32.mrb[0].mxu0
    %313 = vdwg.mxu0
    %v314 = vmax.f32 %v309, 0.0
    %v315 = vld [vmem:[#allocation10] sm:$0xf]
    %v316 = vld [vmem:[#allocation10 + $0x4] sm:$0xf]
    %v317 = vld [vmem:[#allocation10 + $0x8] sm:$0xf]
    %v318 = vld [vmem:[#allocation10 + $0xc] sm:$0xf]
    %v319 = vld [vmem:[#allocation10 + $0x10] sm:$0xf]
    %v320 = vld [vmem:[#allocation10 + $0x14] sm:$0xf]
    %v321 = vld [vmem:[#allocation10 + $0x18] sm:$0xf]
    %v322 = vld [vmem:[#allocation10 + $0x1c] sm:$0xf]
    %v323 = vld [vmem:[#allocation10 + $0x20] sm:$0xf]
    %v324 = vld [vmem:[#allocation10 + $0x24] sm:$0xf]
    %v325 = vld [vmem:[#allocation10 + $0x28] sm:$0xf]
    %v326 = vld [vmem:[#allocation10 + $0x2c] sm:$0xf]
    %v327 = vld [vmem:[#allocation10 + $0x30] sm:$0xf]
    %v328 = vld [vmem:[#allocation10 + $0x34] sm:$0xf]
    %v329 = vld [vmem:[#allocation10 + $0x38] sm:$0xf]
    %v330 = vld [vmem:[#allocation10 + $0x3c] sm:$0xf]
    %v331 = vld [vmem:[%s6] sm:$0xff]
    %v332 = vpack.c.bf16 %v314, %v314
    %v333 = vlaneseq
    %v334 = vshrl.u32 %v333, 7
    %v335 = vsub.s32 0, %v334
    %v336 = vrot.slane %v331, %v335
    %v353 = vunpack.c.l.b16 %v315
    %v354 = vunpack.c.l.b16 %v316
    %v355 = vunpack.c.l.b16 %v317
    %v356 = vunpack.c.l.b16 %v318
    %v357 = vunpack.c.l.b16 %v319
    %v358 = vunpack.c.l.b16 %v320
    %v359 = vunpack.c.l.b16 %v321
    %v360 = vunpack.c.l.b16 %v322
    %v361 = vunpack.c.l.b16 %v323
    %v362 = vunpack.c.l.b16 %v324
    %v363 = vunpack.c.l.b16 %v325
    %v364 = vunpack.c.l.b16 %v326
    %v365 = vunpack.c.l.b16 %v327
    %v366 = vunpack.c.l.b16 %v328
    %v367 = vunpack.c.l.b16 %v329
    %v368 = vunpack.c.l.b16 %v330
    %v369 = vpack.c.b16 %v354, %v353
    %v370 = vpack.c.b16 %v356, %v355
    %v371 = vpack.c.b16 %v358, %v357
    %v372 = vpack.c.b16 %v360, %v359
    %v373 = vpack.c.b16 %v362, %v361
    %v374 = vpack.c.b16 %v364, %v363
    %v375 = vpack.c.b16 %v366, %v365
    %v376 = vpack.c.b16 %v368, %v367
    %385 = vmatprep.subr.bf16.mxu0 0
    %386 = vmatpush1.bf16.msra.mxu0 %v369
    %387 = vmatprep.subr.bf16.mxu0 0
    %388 = vmatpush1.bf16.msra.mxu0 %v370
    %389 = vmatprep.subr.bf16.mxu0 0
    %390 = vmatpush1.bf16.msra.mxu0 %v371
    %391 = vmatprep.subr.bf16.mxu0 0
    %392 = vmatpush1.bf16.msra.mxu0 %v372
    %393 = vmatprep.subr.bf16.mxu0 0
    %394 = vmatpush1.bf16.msra.mxu0 %v373
    %395 = vmatprep.subr.bf16.mxu0 0
    %396 = vmatpush1.bf16.msra.mxu0 %v374
    %397 = vmatprep.subr.bf16.mxu0 0
    %398 = vmatpush1.bf16.msra.mxu0 %v375
    %399 = vmatprep.subr.bf16.mxu0 0
    %400 = vmatpush1.bf16.msra.mxu0 %v376
    %401 = vmatprep.subr.bf16.mxu0 0
    %402 = vmatpush1.bf16.msra.mxu0 0
    %403 = vmatprep.subr.bf16.mxu0 0
    %404 = vmatpush1.bf16.msra.mxu0 0
    %405 = vmatprep.subr.bf16.mxu0 0
    %406 = vmatpush1.bf16.msra.mxu0 0
    %407 = vmatprep.subr.bf16.mxu0 0
    %408 = vmatpush1.bf16.msra.mxu0 0
    %409 = vmatprep.subr.bf16.mxu0 0
    %410 = vmatpush1.bf16.msra.mxu0 0
    %411 = vmatprep.subr.bf16.mxu0 0
    %412 = vmatpush1.bf16.msra.mxu0 0
    %413 = vmatprep.subr.bf16.mxu0 0
    %414 = vmatpush1.bf16.msra.mxu0 0
    %415 = vmatprep.subr.bf16.mxu0 0
    %416 = vmatpush1.bf16.msra.mxu0 0
    %417 = vmatprep.mubr.bf16.mxu0 0
    %418 = vmatmul.mubr.bf16.gmra.mrb[0].mxu0 %v332
    %v419 = vpop.f32.mrb[0].mxu0
    %v420 = vadd.f32 %v336, %v419
    %v421 = vpop.f32.mrb[0].mxu0
    %v422 = vpop.f32.mrb[0].mxu0
    %v423 = vpop.f32.mrb[0].mxu0
    %424 = vdwg.mxu0
    %v425 = vlaneseq
    %v426 = vand.u32 %v425, 127
    %vm427 = vcmp.lt.s32.totalorder %v426, 4
    %v428 = vsel %vm427, %v420, -1e+30
    %429 = vmax.xlane.f32.xlu0 %v428
    %v430 = vpop.xlane.xlu0 %429
    %v431 = vsub.f32 %v428, %v430
    %v432 = vmul.f32 %v431, 1.442695
    %v433 = vpow.pop %v432
    %434 = vadd.xlane.f32.xlu0 %v433
    %v435 = vpop.xlane.xlu0 %434
    %v436 = vrcp.pop %v435
    %v437 = vmul.f32 %v433, %v436
    %438 = vst [vmem:[#allocation11] sm:$0xff] %v437
    // Predicated region
    $region50: #{tpu_custom_call.1} parent=1 // pred_check
      _
    $region51: #{tpu_custom_call.1} parent=1 // pred_check_branch
      %440 = sbr.rel (0) target = $region53
    $region52: #{tpu_custom_call.1} parent=1 // pred_region
      %s442 = ssub.s32 128, 128
      %443 = vsyncadd [#allocation4], %s442
      %s445 = sshll.u32 [#allocation11], 4
      %s446 = int_to_ptr.vmem [resolvable:$true] %s445
      %448 = dma.vmem_to_hbm [thread:$0]  %s446, 128, %s7, [#allocation4]
    $region53: #{tpu_custom_call.1} parent=1 // pred_fallthru
      _
    // Predicated region
    $region54: #{tpu_custom_call.1} parent=1 // pred_check
      _
    $region55: #{tpu_custom_call.1} parent=1 // pred_check_branch
      %450 = sbr.rel (0) target = $region57
    $region56: #{tpu_custom_call.1} parent=1 // pred_region
      %451 = dma.done [#allocation4], 128
    $region57: #{tpu_custom_call.1} parent=1 // pred_fallthru
      _
    %452 = vsyncpa [#allocation3], 1
    %453 = vsyncpa [#allocation6], 1
    %454 = vsyncpa [#allocation9], 1
    %455 = vsyncpa [#allocation4], 1

</llo_original>
